<compile_context>
chip_gen: v5e
topology: v5e:2x2
jax: 0.10.0
libtpu: 0.0.40
codegen_flags: <defaults>
</compile_context>

<pallas_src>
import functools

import jax
import jax.numpy as jnp
from jax.experimental import pallas as pl
from jax.experimental.pallas import tpu as pltpu


# -----------------------------------------------------------------------------
# Fused kernel: whole network, whole batch, one invocation.
#   x_ref : (N, C0, H0, W0)  raw NCHW input (relayout folded into layer-0 matmuls)
#   per layer l:
#     r_ref : layer 0 -> (Ci, W, 3*X)   per-input-channel, kh concatenated along columns
#             layer>0 -> (W*Ci, 3*X)    kh concatenated along columns
#     u_ref : (N*Ho, 3*N*H)             row-upsample+pad+kh-sum+batch fold
#     b_ref : (1, X)                    bias tiled over output columns (X = Wo*Co)
#   o_ref : (N*H_last, W_last*C_last)   batch-stacked flattened NHWC
#   t_refs: per layer (3*N*H, X) f32 VMEM scratch holding the stacked t_kh blocks
# -----------------------------------------------------------------------------
def _fused_upsample_cnn_kernel(x_ref, *refs, num_layers, relu_flags, dims, n_batch):
    o_ref = refs[3 * num_layers]
    t_refs = refs[3 * num_layers + 1:]
    N = n_batch

    a = None                                            # batch-stacked activation (N*H, W*C)
    for li in range(num_layers):
        H, W, Ci, Co = dims[li]
        Wo = 2 * W
        X = Wo * Co
        NH = N * H
        r_ref = refs[3 * li]
        u_ref = refs[3 * li + 1]
        b_ref = refs[3 * li + 2]
        t_ref = t_refs[li]

        if li == 0:
            # R stage, layer 0: consume raw NCHW; per-(n, ci) matmuls fold the
            # NCHW->NHWC relayout into the MXU (no in-kernel transpose/reshape).
            for n in range(N):
                t_w = None
                for ci in range(Ci):
                    p = jnp.dot(x_ref[n, ci], r_ref[ci],
                                preferred_element_type=jnp.float32)      # (H, 3X)
                    t_w = p if t_w is None else t_w + p
                for kh in range(3):                                       # (H, X) aligned copies
                    t_ref[kh * NH + n * H: kh * NH + (n + 1) * H, :] = (
                        t_w[:, kh * X:(kh + 1) * X])
        else:
            # R stage, layer >= 1: ONE batch-stacked matmul (kh in wide columns).
            t_w = jnp.dot(a, r_ref[...], preferred_element_type=jnp.float32)  # (NH, 3X)
            for kh in range(3):                                           # (NH, X) aligned copies
                t_ref[kh * NH:(kh + 1) * NH, :] = t_w[:, kh * X:(kh + 1) * X]

        # U stage: one matmul does row-upsample + row-pad + kh accumulation for the
        # whole batch: (N*Ho, 3*N*H) @ (3*N*H, X) -> (N*Ho, X).
        a = jnp.dot(u_ref[...], t_ref[...], preferred_element_type=jnp.float32)
        a = a + b_ref[...]                               # bias broadcast over rows (VPU)
        if relu_flags[li]:
            a = jnp.maximum(a, 0.0)

    o_ref[...] = a.astype(o_ref.dtype)                   # single lane-dense (rows, 128) store


# -----------------------------------------------------------------------------
# Host-side structural matrices for one layer (same math as the validated version).
#   w_hwio: (3, 3, Cin, Cout)   (w_hwio[kh, kw, ci, co] == torch_w[co, ci, kh, kw])
#   H, W  : spatial size of THIS layer's input (pre-upsample)
# Returns U (3, Ho, H), R (3, W*Ci, Wo*Co), bflat (1, Wo*Co).
# -----------------------------------------------------------------------------
def _build_layer_mats(w_hwio, b, H, W):
    Ci, Co = w_hwio.shape[2], w_hwio.shape[3]
    Ho, Wo = 2 * H, 2 * W

    # U[kh][y, h] = 1  iff  1 <= y+kh <= 2H  and  (y+kh-1)//2 == h
    y = jnp.arange(Ho)[:, None]
    h = jnp.arange(H)[None, :]
    U = []
    for kh in range(3):
        r = y + kh
        valid = (r >= 1) & (r <= Ho)
        U.append(((r - 1) // 2 == h) & valid)
    U = jnp.stack(U).astype(jnp.float32)                          # (3, Ho, H)

    # R[kh][w*Ci+ci, x*Co+co] = sum_kw w[kh,kw,ci,co] * [1<=x+kw<=2W] * [((x+kw)-1)//2 == w]
    xcol = jnp.arange(Wo)[:, None]
    kw = jnp.arange(3)[None, :]
    c = xcol + kw
    validc = (c >= 1) & (c <= Wo)
    src_w = jnp.clip((c - 1) // 2, 0, W - 1)
    sel = (src_w[None] == jnp.arange(W)[:, None, None]) & validc[None]    # (W, Wo, 3)
    R = jnp.einsum('wxk,hkic->hwixc', sel.astype(jnp.float32), w_hwio,
                   precision=jax.lax.Precision.HIGHEST)
    R = R.reshape(3, W * Ci, Wo * Co)

    bflat = jnp.tile(b, Wo)[None, :]                              # (1, Wo*Co)
    return U, R, bflat


# -----------------------------------------------------------------------------
# Precompute the fused-kernel operands ONCE per parameter set (cache & reuse).
# -----------------------------------------------------------------------------
def build_fused_operands(params, x_shape):
    N, C0, H0, W0 = x_shape
    mats = []
    H, W = H0, W0
    for li, (w, b) in enumerate(params):
        Ci, Co = w.shape[2], w.shape[3]
        U, R, bflat = _build_layer_mats(w, b, H, W)
        Ho, Wo = 2 * H, 2 * W
        X = Wo * Co

        # Batch + kh fold for the U stage:
        #   U_all[n*Ho+y, kh*N*H + m*H + h] = U[kh, y, h] * (m == n)
        eye = jnp.eye(N, dtype=jnp.float32)
        U_all = jnp.einsum('nm,kyh->nykmh', eye, U).reshape(N * Ho, 3 * N * H)

        if li == 0:
            # Per-input-channel slabs, kh concatenated along columns:
            #   R_pc[ci][w, kh*X+col] = R[kh][w*Ci+ci, col]
            R_pack = R.reshape(3, W, Ci, X).transpose(2, 1, 0, 3).reshape(Ci, W, 3 * X)
        else:
            # kh concatenated along columns: R_wide[row, kh*X+col] = R[kh][row, col]
            R_pack = R.transpose(1, 0, 2).reshape(W * Ci, 3 * X)

        mats += [R_pack, U_all, bflat]
        H, W = Ho, Wo
    return tuple(mats)


# -----------------------------------------------------------------------------
# Forward pass: one fused pallas_call (no grid) for the whole batch & network.
# -----------------------------------------------------------------------------
@jax.jit
def upsample_cnn_forward(x_nchw, mats):
    N, C0, H0, W0 = x_nchw.shape
    num_layers = len(mats) // 3
    relu_flags = tuple(i < num_layers - 1 for i in range(num_layers))

    dims = []
    H, W, Ci = H0, W0, C0
    for li in range(num_layers):
        X = mats[3 * li + 2].shape[1]            # bias width = Wo * Co
        Co = X // (2 * W)
        dims.append((H, W, Ci, Co))
        H, W, Ci = 2 * H, 2 * W, Co
    Ho, Wo, C_last = H, W, Ci

    vmem = pltpu.MemorySpace.VMEM
    kernel = functools.partial(
        _fused_upsample_cnn_kernel,
        num_layers=num_layers, relu_flags=relu_flags, dims=tuple(dims), n_batch=N)

    out_flat = pl.pallas_call(
        kernel,
        out_shape=jax.ShapeDtypeStruct((N * Ho, Wo * C_last), x_nchw.dtype),
        # No grid: everything resides whole in VMEM (single-buffered by construction);
        # working set ~0.4 MiB << VMEM on v5e/v6e/v7x.
        in_specs=[pl.BlockSpec(memory_space=vmem)] * (1 + 3 * num_layers),
        out_specs=pl.BlockSpec(memory_space=vmem),
        scratch_shapes=[pltpu.VMEM((3 * N * d[0], 2 * d[1] * d[3]), jnp.float32)
                        for d in dims],
    )(x_nchw, *mats)

    # Single tiny boundary layout op kept outside (flattened NHWC -> NCHW), under the jit.
    return jnp.transpose(out_flat.reshape(N, Ho, Wo, C_last), (0, 3, 1, 2))


# -----------------------------------------------------------------------------
# Parameter init (deterministic, mimics PyTorch Conv2d default uniform bounds).
# Weights stored in HWIO: w[kh, kw, ci, co] == torch_w[co, ci, kh, kw].
# -----------------------------------------------------------------------------
def init_params(key, structure):
    params = []
    for i in range(len(structure) - 1):
        cin, cout = structure[i], structure[i + 1]
        key, kw_, kb_ = jax.random.split(key, 3)
        bound = 1.0 / jnp.sqrt(cin * 3.0 * 3.0)
        w = jax.random.uniform(kw_, (3, 3, cin, cout), jnp.float32, -bound, bound)
        b = jax.random.uniform(kb_, (cout,), jnp.float32, -bound, bound)
        params.append((w, b))
    return params


# -----------------------------------------------------------------------------
# Pure-JAX reference (nearest Upsample x2 -> pad=1 -> 3x3 conv -> bias -> ReLU*).
# -----------------------------------------------------------------------------
def reference_forward(x_nchw, params):
    x = jnp.transpose(x_nchw, (0, 2, 3, 1))
    n_layers = len(params)
    for i, (w, b) in enumerate(params):
        x = jnp.repeat(jnp.repeat(x, 2, axis=1), 2, axis=2)
        xp = jnp.pad(x, ((0, 0), (1, 1), (1, 1), (0, 0)))
        H, W = xp.shape[1] - 2, xp.shape[2] - 2
        out = jnp.zeros((xp.shape[0], H, W, w.shape[-1]), jnp.float32)
        for kh in range(3):
            for kw in range(3):
                out = out + jnp.einsum(
                    'nhwc,cd->nhwd', xp[:, kh:kh + H, kw:kw + W, :], w[kh, kw],
                    precision=jax.lax.Precision.HIGHEST)
        out = out + b
        if i < n_layers - 1:
            out = jnp.maximum(out, 0.0)
        x = out
    return jnp.transpose(x, (0, 3, 1, 2))


if __name__ == "__main__":
    structure = [4, 8, 4]  # args.structure
    key = jax.random.PRNGKey(0)
    key, kx = jax.random.split(key)

    # Small NCHW input consistent with the module: C = structure[0]
    x = jax.random.normal(kx, (2, structure[0], 8, 8), jnp.float32)
    params = init_params(key, structure)

    # Structural matrices are built ONCE and reused across forward calls.
    mats = build_fused_operands(params, x.shape)

    out = jax.block_until_ready(upsample_cnn_forward(x, mats))

    expected_shape = (2, structure[-1],
                      8 * 2 ** (len(structure) - 1),
                      8 * 2 ** (len(structure) - 1))
    assert out.shape == expected_shape, (out.shape, expected_shape)
    assert out.dtype == jnp.float32

    ref = jax.block_until_ready(reference_forward(x, params))
    max_err = float(jnp.max(jnp.abs(out - ref)))
    assert max_err < 5e-3, f"max abs error vs reference: {max_err}"

    print("KERNEL_OK")
</pallas_src>

<mosaic_0001>
module attributes {stable_mosaic.version = 11 : i64} {
  func.func @_fused_upsample_cnn_kernel(%arg0: memref<2x4x8x8xf32, #tpu.memory_space<vmem>>, %arg1: memref<4x8x384xf32, #tpu.memory_space<vmem>>, %arg2: memref<32x48xf32, #tpu.memory_space<vmem>>, %arg3: memref<1x128xf32, #tpu.memory_space<vmem>>, %arg4: memref<128x384xf32, #tpu.memory_space<vmem>>, %arg5: memref<64x96xf32, #tpu.memory_space<vmem>>, %arg6: memref<1x128xf32, #tpu.memory_space<vmem>>, %arg7: memref<64x128xf32, #tpu.memory_space<vmem>>, %arg8: memref<48x128xf32, #tpu.memory_space<vmem>>, %arg9: memref<96x128xf32, #tpu.memory_space<vmem>>) attributes {dimension_semantics = [], scalar_prefetch = 0 : i64, scratch_operands = 2 : i64, tpu.core_type = #tpu.core_type<tc>} {
    %c0 = arith.constant 0 : index
    %c0_0 = arith.constant 0 : index
    %c0_1 = arith.constant 0 : index
    %c0_2 = arith.constant 0 : index
    %0 = vector.load %arg0[%c0, %c0_0, %c0_1, %c0_2] : memref<2x4x8x8xf32, #tpu.memory_space<vmem>>, vector<1x1x8x8xf32>
    %1 = vector.shape_cast %0 : vector<1x1x8x8xf32> to vector<8x8xf32>
    %c0_3 = arith.constant 0 : index
    %c0_4 = arith.constant 0 : index
    %c0_5 = arith.constant 0 : index
    %2 = vector.load %arg1[%c0_3, %c0_4, %c0_5] : memref<4x8x384xf32, #tpu.memory_space<vmem>>, vector<1x8x384xf32>
    %3 = vector.shape_cast %2 : vector<1x8x384xf32> to vector<8x384xf32>
    %cst = arith.constant dense<0.000000e+00> : vector<8x384xf32>
    %4 = tpu.matmul %1, %3, %cst {dimension_numbers = #tpu.dot_dimension_numbers<[1], [0], [0], [1], [0, 0, 1, 1], [], []>} : vector<8x8xf32>, vector<8x384xf32>, vector<8x384xf32> -> vector<8x384xf32>
    %c0_6 = arith.constant 0 : index
    %c1 = arith.constant 1 : index
    %c0_7 = arith.constant 0 : index
    %c0_8 = arith.constant 0 : index
    %5 = vector.load %arg0[%c0_6, %c1, %c0_7, %c0_8] : memref<2x4x8x8xf32, #tpu.memory_space<vmem>>, vector<1x1x8x8xf32>
    %6 = vector.shape_cast %5 : vector<1x1x8x8xf32> to vector<8x8xf32>
    %c1_9 = arith.constant 1 : index
    %c0_10 = arith.constant 0 : index
    %c0_11 = arith.constant 0 : index
    %7 = vector.load %arg1[%c1_9, %c0_10, %c0_11] : memref<4x8x384xf32, #tpu.memory_space<vmem>>, vector<1x8x384xf32>
    %8 = vector.shape_cast %7 : vector<1x8x384xf32> to vector<8x384xf32>
    %cst_12 = arith.constant dense<0.000000e+00> : vector<8x384xf32>
    %9 = tpu.matmul %6, %8, %cst_12 {dimension_numbers = #tpu.dot_dimension_numbers<[1], [0], [0], [1], [0, 0, 1, 1], [], []>} : vector<8x8xf32>, vector<8x384xf32>, vector<8x384xf32> -> vector<8x384xf32>
    %10 = arith.addf %4, %9 : vector<8x384xf32>
    %c0_13 = arith.constant 0 : index
    %c2 = arith.constant 2 : index
    %c0_14 = arith.constant 0 : index
    %c0_15 = arith.constant 0 : index
    %11 = vector.load %arg0[%c0_13, %c2, %c0_14, %c0_15] : memref<2x4x8x8xf32, #tpu.memory_space<vmem>>, vector<1x1x8x8xf32>
    %12 = vector.shape_cast %11 : vector<1x1x8x8xf32> to vector<8x8xf32>
    %c2_16 = arith.constant 2 : index
    %c0_17 = arith.constant 0 : index
    %c0_18 = arith.constant 0 : index
    %13 = vector.load %arg1[%c2_16, %c0_17, %c0_18] : memref<4x8x384xf32, #tpu.memory_space<vmem>>, vector<1x8x384xf32>
    %14 = vector.shape_cast %13 : vector<1x8x384xf32> to vector<8x384xf32>
    %cst_19 = arith.constant dense<0.000000e+00> : vector<8x384xf32>
    %15 = tpu.matmul %12, %14, %cst_19 {dimension_numbers = #tpu.dot_dimension_numbers<[1], [0], [0], [1], [0, 0, 1, 1], [], []>} : vector<8x8xf32>, vector<8x384xf32>, vector<8x384xf32> -> vector<8x384xf32>
    %16 = arith.addf %10, %15 : vector<8x384xf32>
    %c0_20 = arith.constant 0 : index
    %c3 = arith.constant 3 : index
    %c0_21 = arith.constant 0 : index
    %c0_22 = arith.constant 0 : index
    %17 = vector.load %arg0[%c0_20, %c3, %c0_21, %c0_22] : memref<2x4x8x8xf32, #tpu.memory_space<vmem>>, vector<1x1x8x8xf32>
    %18 = vector.shape_cast %17 : vector<1x1x8x8xf32> to vector<8x8xf32>
    %c3_23 = arith.constant 3 : index
    %c0_24 = arith.constant 0 : index
    %c0_25 = arith.constant 0 : index
    %19 = vector.load %arg1[%c3_23, %c0_24, %c0_25] : memref<4x8x384xf32, #tpu.memory_space<vmem>>, vector<1x8x384xf32>
    %20 = vector.shape_cast %19 : vector<1x8x384xf32> to vector<8x384xf32>
    %cst_26 = arith.constant dense<0.000000e+00> : vector<8x384xf32>
    %21 = tpu.matmul %18, %20, %cst_26 {dimension_numbers = #tpu.dot_dimension_numbers<[1], [0], [0], [1], [0, 0, 1, 1], [], []>} : vector<8x8xf32>, vector<8x384xf32>, vector<8x384xf32> -> vector<8x384xf32>
    %22 = arith.addf %16, %21 : vector<8x384xf32>
    %23 = vector.extract_strided_slice %22 {offsets = [0, 0], sizes = [8, 128], strides = [1, 1]} : vector<8x384xf32> to vector<8x128xf32>
    %c0_27 = arith.constant 0 : index
    %c0_28 = arith.constant 0 : index
    %24 = vector.load %arg8[%c0_27, %c0_28] : memref<48x128xf32, #tpu.memory_space<vmem>>, vector<8x128xf32>
    tpu.vector_store %arg8[%c0_27, %c0_28], %23 {strides = array<i32>} : memref<48x128xf32, #tpu.memory_space<vmem>>, vector<8x128xf32>,
    %25 = vector.extract_strided_slice %22 {offsets = [0, 128], sizes = [8, 128], strides = [1, 1]} : vector<8x384xf32> to vector<8x128xf32>
    %c16 = arith.constant 16 : index
    %c0_29 = arith.constant 0 : index
    %26 = vector.load %arg8[%c16, %c0_29] : memref<48x128xf32, #tpu.memory_space<vmem>>, vector<8x128xf32>
    tpu.vector_store %arg8[%c16, %c0_29], %25 {strides = array<i32>} : memref<48x128xf32, #tpu.memory_space<vmem>>, vector<8x128xf32>,
    %27 = vector.extract_strided_slice %22 {offsets = [0, 256], sizes = [8, 128], strides = [1, 1]} : vector<8x384xf32> to vector<8x128xf32>
    %c32 = arith.constant 32 : index
    %c0_30 = arith.constant 0 : index
    %28 = vector.load %arg8[%c32, %c0_30] : memref<48x128xf32, #tpu.memory_space<vmem>>, vector<8x128xf32>
    tpu.vector_store %arg8[%c32, %c0_30], %27 {strides = array<i32>} : memref<48x128xf32, #tpu.memory_space<vmem>>, vector<8x128xf32>,
    %c1_31 = arith.constant 1 : index
    %c0_32 = arith.constant 0 : index
    %c0_33 = arith.constant 0 : index
    %c0_34 = arith.constant 0 : index
    %29 = vector.load %arg0[%c1_31, %c0_32, %c0_33, %c0_34] : memref<2x4x8x8xf32, #tpu.memory_space<vmem>>, vector<1x1x8x8xf32>
    %30 = vector.shape_cast %29 : vector<1x1x8x8xf32> to vector<8x8xf32>
    %c0_35 = arith.constant 0 : index
    %c0_36 = arith.constant 0 : index
    %c0_37 = arith.constant 0 : index
    %31 = vector.load %arg1[%c0_35, %c0_36, %c0_37] : memref<4x8x384xf32, #tpu.memory_space<vmem>>, vector<1x8x384xf32>
    %32 = vector.shape_cast %31 : vector<1x8x384xf32> to vector<8x384xf32>
    %cst_38 = arith.constant dense<0.000000e+00> : vector<8x384xf32>
    %33 = tpu.matmul %30, %32, %cst_38 {dimension_numbers = #tpu.dot_dimension_numbers<[1], [0], [0], [1], [0, 0, 1, 1], [], []>} : vector<8x8xf32>, vector<8x384xf32>, vector<8x384xf32> -> vector<8x384xf32>
    %c1_39 = arith.constant 1 : index
    %c1_40 = arith.constant 1 : index
    %c0_41 = arith.constant 0 : index
    %c0_42 = arith.constant 0 : index
    %34 = vector.load %arg0[%c1_39, %c1_40, %c0_41, %c0_42] : memref<2x4x8x8xf32, #tpu.memory_space<vmem>>, vector<1x1x8x8xf32>
    %35 = vector.shape_cast %34 : vector<1x1x8x8xf32> to vector<8x8xf32>
    %c1_43 = arith.constant 1 : index
    %c0_44 = arith.constant 0 : index
    %c0_45 = arith.constant 0 : index
    %36 = vector.load %arg1[%c1_43, %c0_44, %c0_45] : memref<4x8x384xf32, #tpu.memory_space<vmem>>, vector<1x8x384xf32>
    %37 = vector.shape_cast %36 : vector<1x8x384xf32> to vector<8x384xf32>
    %cst_46 = arith.constant dense<0.000000e+00> : vector<8x384xf32>
    %38 = tpu.matmul %35, %37, %cst_46 {dimension_numbers = #tpu.dot_dimension_numbers<[1], [0], [0], [1], [0, 0, 1, 1], [], []>} : vector<8x8xf32>, vector<8x384xf32>, vector<8x384xf32> -> vector<8x384xf32>
    %39 = arith.addf %33, %38 : vector<8x384xf32>
    %c1_47 = arith.constant 1 : index
    %c2_48 = arith.constant 2 : index
    %c0_49 = arith.constant 0 : index
    %c0_50 = arith.constant 0 : index
    %40 = vector.load %arg0[%c1_47, %c2_48, %c0_49, %c0_50] : memref<2x4x8x8xf32, #tpu.memory_space<vmem>>, vector<1x1x8x8xf32>
    %41 = vector.shape_cast %40 : vector<1x1x8x8xf32> to vector<8x8xf32>
    %c2_51 = arith.constant 2 : index
    %c0_52 = arith.constant 0 : index
    %c0_53 = arith.constant 0 : index
    %42 = vector.load %arg1[%c2_51, %c0_52, %c0_53] : memref<4x8x384xf32, #tpu.memory_space<vmem>>, vector<1x8x384xf32>
    %43 = vector.shape_cast %42 : vector<1x8x384xf32> to vector<8x384xf32>
    %cst_54 = arith.constant dense<0.000000e+00> : vector<8x384xf32>
    %44 = tpu.matmul %41, %43, %cst_54 {dimension_numbers = #tpu.dot_dimension_numbers<[1], [0], [0], [1], [0, 0, 1, 1], [], []>} : vector<8x8xf32>, vector<8x384xf32>, vector<8x384xf32> -> vector<8x384xf32>
    %45 = arith.addf %39, %44 : vector<8x384xf32>
    %c1_55 = arith.constant 1 : index
    %c3_56 = arith.constant 3 : index
    %c0_57 = arith.constant 0 : index
    %c0_58 = arith.constant 0 : index
    %46 = vector.load %arg0[%c1_55, %c3_56, %c0_57, %c0_58] : memref<2x4x8x8xf32, #tpu.memory_space<vmem>>, vector<1x1x8x8xf32>
    %47 = vector.shape_cast %46 : vector<1x1x8x8xf32> to vector<8x8xf32>
    %c3_59 = arith.constant 3 : index
    %c0_60 = arith.constant 0 : index
    %c0_61 = arith.constant 0 : index
    %48 = vector.load %arg1[%c3_59, %c0_60, %c0_61] : memref<4x8x384xf32, #tpu.memory_space<vmem>>, vector<1x8x384xf32>
    %49 = vector.shape_cast %48 : vector<1x8x384xf32> to vector<8x384xf32>
    %cst_62 = arith.constant dense<0.000000e+00> : vector<8x384xf32>
    %50 = tpu.matmul %47, %49, %cst_62 {dimension_numbers = #tpu.dot_dimension_numbers<[1], [0], [0], [1], [0, 0, 1, 1], [], []>} : vector<8x8xf32>, vector<8x384xf32>, vector<8x384xf32> -> vector<8x384xf32>
    %51 = arith.addf %45, %50 : vector<8x384xf32>
    %52 = vector.extract_strided_slice %51 {offsets = [0, 0], sizes = [8, 128], strides = [1, 1]} : vector<8x384xf32> to vector<8x128xf32>
    %c8 = arith.constant 8 : index
    %c0_63 = arith.constant 0 : index
    %53 = vector.load %arg8[%c8, %c0_63] : memref<48x128xf32, #tpu.memory_space<vmem>>, vector<8x128xf32>
    tpu.vector_store %arg8[%c8, %c0_63], %52 {strides = array<i32>} : memref<48x128xf32, #tpu.memory_space<vmem>>, vector<8x128xf32>,
    %54 = vector.extract_strided_slice %51 {offsets = [0, 128], sizes = [8, 128], strides = [1, 1]} : vector<8x384xf32> to vector<8x128xf32>
    %c24 = arith.constant 24 : index
    %c0_64 = arith.constant 0 : index
    %55 = vector.load %arg8[%c24, %c0_64] : memref<48x128xf32, #tpu.memory_space<vmem>>, vector<8x128xf32>
    tpu.vector_store %arg8[%c24, %c0_64], %54 {strides = array<i32>} : memref<48x128xf32, #tpu.memory_space<vmem>>, vector<8x128xf32>,
    %56 = vector.extract_strided_slice %51 {offsets = [0, 256], sizes = [8, 128], strides = [1, 1]} : vector<8x384xf32> to vector<8x128xf32>
    %c40 = arith.constant 40 : index
    %c0_65 = arith.constant 0 : index
    %57 = vector.load %arg8[%c40, %c0_65] : memref<48x128xf32, #tpu.memory_space<vmem>>, vector<8x128xf32>
    tpu.vector_store %arg8[%c40, %c0_65], %56 {strides = array<i32>} : memref<48x128xf32, #tpu.memory_space<vmem>>, vector<8x128xf32>,
    %c0_66 = arith.constant 0 : index
    %c0_67 = arith.constant 0 : index
    %58 = vector.load %arg2[%c0_66, %c0_67] : memref<32x48xf32, #tpu.memory_space<vmem>>, vector<32x48xf32>
    %c0_68 = arith.constant 0 : index
    %c0_69 = arith.constant 0 : index
    %59 = vector.load %arg8[%c0_68, %c0_69] : memref<48x128xf32, #tpu.memory_space<vmem>>, vector<48x128xf32>
    %cst_70 = arith.constant dense<0.000000e+00> : vector<32x128xf32>
    %60 = tpu.matmul %58, %59, %cst_70 {dimension_numbers = #tpu.dot_dimension_numbers<[1], [0], [0], [1], [0, 0, 1, 1], [], []>} : vector<32x48xf32>, vector<48x128xf32>, vector<32x128xf32> -> vector<32x128xf32>
    %c0_71 = arith.constant 0 : index
    %c0_72 = arith.constant 0 : index
    %61 = vector.load %arg3[%c0_71, %c0_72] : memref<1x128xf32, #tpu.memory_space<vmem>>, vector<1x128xf32>
    %62 = vector.broadcast %61 : vector<1x128xf32> to vector<32x128xf32>
    %63 = arith.addf %60, %62 : vector<32x128xf32>
    %cst_73 = arith.constant 0.000000e+00 : f32
    %64 = vector.broadcast %cst_73 : f32 to vector<32x128xf32>
    %65 = arith.maximumf %63, %64 : vector<32x128xf32>
    %c0_74 = arith.constant 0 : index
    %c0_75 = arith.constant 0 : index
    %66 = vector.load %arg4[%c0_74, %c0_75] : memref<128x384xf32, #tpu.memory_space<vmem>>, vector<128x384xf32>
    %cst_76 = arith.constant dense<0.000000e+00> : vector<32x384xf32>
    %67 = tpu.matmul %65, %66, %cst_76 {dimension_numbers = #tpu.dot_dimension_numbers<[1], [0], [0], [1], [0, 0, 1, 1], [], []>} : vector<32x128xf32>, vector<128x384xf32>, vector<32x384xf32> -> vector<32x384xf32>
    %68 = vector.extract_strided_slice %67 {offsets = [0, 0], sizes = [32, 128], strides = [1, 1]} : vector<32x384xf32> to vector<32x128xf32>
    %c0_77 = arith.constant 0 : index
    %c0_78 = arith.constant 0 : index
    %69 = vector.load %arg9[%c0_77, %c0_78] : memref<96x128xf32, #tpu.memory_space<vmem>>, vector<32x128xf32>
    tpu.vector_store %arg9[%c0_77, %c0_78], %68 {strides = array<i32>} : memref<96x128xf32, #tpu.memory_space<vmem>>, vector<32x128xf32>,
    %70 = vector.extract_strided_slice %67 {offsets = [0, 128], sizes = [32, 128], strides = [1, 1]} : vector<32x384xf32> to vector<32x128xf32>
    %c32_79 = arith.constant 32 : index
    %c0_80 = arith.constant 0 : index
    %71 = vector.load %arg9[%c32_79, %c0_80] : memref<96x128xf32, #tpu.memory_space<vmem>>, vector<32x128xf32>
    tpu.vector_store %arg9[%c32_79, %c0_80], %70 {strides = array<i32>} : memref<96x128xf32, #tpu.memory_space<vmem>>, vector<32x128xf32>,
    %72 = vector.extract_strided_slice %67 {offsets = [0, 256], sizes = [32, 128], strides = [1, 1]} : vector<32x384xf32> to vector<32x128xf32>
    %c64 = arith.constant 64 : index
    %c0_81 = arith.constant 0 : index
    %73 = vector.load %arg9[%c64, %c0_81] : memref<96x128xf32, #tpu.memory_space<vmem>>, vector<32x128xf32>
    tpu.vector_store %arg9[%c64, %c0_81], %72 {strides = array<i32>} : memref<96x128xf32, #tpu.memory_space<vmem>>, vector<32x128xf32>,
    %c0_82 = arith.constant 0 : index
    %c0_83 = arith.constant 0 : index
    %74 = vector.load %arg5[%c0_82, %c0_83] : memref<64x96xf32, #tpu.memory_space<vmem>>, vector<64x96xf32>
    %c0_84 = arith.constant 0 : index
    %c0_85 = arith.constant 0 : index
    %75 = vector.load %arg9[%c0_84, %c0_85] : memref<96x128xf32, #tpu.memory_space<vmem>>, vector<96x128xf32>
    %cst_86 = arith.constant dense<0.000000e+00> : vector<64x128xf32>
    %76 = tpu.matmul %74, %75, %cst_86 {dimension_numbers = #tpu.dot_dimension_numbers<[1], [0], [0], [1], [0, 0, 1, 1], [], []>} : vector<64x96xf32>, vector<96x128xf32>, vector<64x128xf32> -> vector<64x128xf32>
    %c0_87 = arith.constant 0 : index
    %c0_88 = arith.constant 0 : index
    %77 = vector.load %arg6[%c0_87, %c0_88] : memref<1x128xf32, #tpu.memory_space<vmem>>, vector<1x128xf32>
    %78 = vector.broadcast %77 : vector<1x128xf32> to vector<64x128xf32>
    %79 = arith.addf %76, %78 : vector<64x128xf32>
    %c0_89 = arith.constant 0 : index
    %c0_90 = arith.constant 0 : index
    %80 = vector.load %arg7[%c0_89, %c0_90] : memref<64x128xf32, #tpu.memory_space<vmem>>, vector<64x128xf32>
    tpu.vector_store %arg7[%c0_89, %c0_90], %79 {strides = array<i32>} : memref<64x128xf32, #tpu.memory_space<vmem>>, vector<64x128xf32>,
    return
  }
}

</mosaic_0001>

<llo_original>
// kernel: upsample_cnn_forward.1
$region0: #{upsample_cnn_forward.1}
  #allocation0 [shape = 'u32[]', space=smem, size = 0x4, offset = 0x4, fixed_abs, tag = 'smem constant byte address 0x4 - core index']
  #allocation1 [shape = 'u32[72,128]{1,0:T(1,128)}', space=vmem, size = 0x9000, scoped, tag = 'internal scratch']
  #allocation2 [shape = 'f32[48,128]{1,0:T(8,128)}', space=vmem, size = 0x6000, scoped, tag = 'scratch operand']
  #allocation3 [shape = 'f32[96,128]{1,0:T(8,128)}', space=vmem, size = 0xc000, scoped, tag = 'scratch operand']
  %s0 = inlined_call_operand.hbm [shape: f32[2,4,8,8], index: 0, kind: input, shape index: {}]
  %s1 = inlined_call_operand.hbm [shape: f32[4,8,384], index: 1, kind: input, shape index: {}]
  %s2 = inlined_call_operand.hbm [shape: f32[32,48], index: 2, kind: input, shape index: {}]
  %s3 = inlined_call_operand.vmem [shape: f32[1,128], index: 3, kind: input, shape index: {}]
  %s4 = inlined_call_operand.hbm [shape: f32[128,384], index: 4, kind: input, shape index: {}]
  %s5 = inlined_call_operand.hbm [shape: f32[64,96], index: 5, kind: input, shape index: {}]
  %s6 = inlined_call_operand.vmem [shape: f32[1,128], index: 6, kind: input, shape index: {}]
  %s7 = inlined_call_operand.vmem [shape: f32[64,128], index: 7, kind: output, shape index: {}]
  %s8 = sld [smem:[#allocation0]]
  $region58: #{upsample_cnn_forward.1} parent=0
    _
  %s10 = ssub.s32 1, %s8
  %s11 = scalar_select 0, %s10, %s8
  $region1: #{upsample_cnn_forward.1} parent=0
    #allocation4 [shape = 'u8[32768]{0}', space=vmem, size = 0x8000, scoped, tag = 'input window, operand 0, single buffered']
    #allocation5 [shape = 's32[1]{0}', space=sflag, size = 0x4, scoped, tag = 'scoped memory for upsample_cnn_forward.1']
    #allocation6 [shape = 'u8[49152]{0}', space=vmem, size = 0xc000, scoped, tag = 'input window, operand 1, single buffered']
    #allocation7 [shape = 's32[1]{0}', space=sflag, size = 0x4, scoped, tag = 'scoped memory for upsample_cnn_forward.1']
    #allocation8 [shape = 'u8[16384]{0}', space=vmem, size = 0x4000, scoped, tag = 'input window, operand 2, single buffered']
    #allocation9 [shape = 'u8[196608]{0}', space=vmem, size = 0x30000, scoped, tag = 'input window, operand 4, single buffered']
    #allocation10 [shape = 's32[1]{0}', space=sflag, size = 0x4, scoped, tag = 'scoped memory for upsample_cnn_forward.1']
    #allocation11 [shape = 'u8[32768]{0}', space=vmem, size = 0x8000, scoped, tag = 'input window, operand 5, single buffered']
    %12 = vsyncpa [#allocation5], 0
    %13 = vsyncpa [#allocation7], 0
    %14 = vsyncpa [#allocation10], 0
    // Predicated region
    $region2: #{upsample_cnn_forward.1} parent=1 // pred_check
      _
    $region3: #{upsample_cnn_forward.1} parent=1 // pred_check_branch
      %16 = sbr.rel (0) target = $region5
    $region4: #{upsample_cnn_forward.1} parent=1 // pred_region
      %18 = vsyncadd [#allocation5], 0
      %s19 = sshll.u32 %s0, 4
      %s20 = int_to_ptr.hbm [resolvable:$true] %s19
      %s21 = sshll.u32 [#allocation4], 4
      %s22 = int_to_ptr.vmem [resolvable:$true] %s21
      %27 = dma.hbm_to_vmem [thread:$0]  %s20, 1024, %s22, [#allocation5], 128, 128, 8
    $region5: #{upsample_cnn_forward.1} parent=1 // pred_fallthru
      _
    // Predicated region
    $region6: #{upsample_cnn_forward.1} parent=1 // pred_check
      _
    $region7: #{upsample_cnn_forward.1} parent=1 // pred_check_branch
      %29 = sbr.rel (0) target = $region9
    $region8: #{upsample_cnn_forward.1} parent=1 // pred_region
      %31 = vsyncadd [#allocation7], 0
      %s32 = sshll.u32 %s1, 4
      %s33 = int_to_ptr.hbm [resolvable:$true] %s32
      %s34 = sshll.u32 [#allocation6], 4
      %s35 = int_to_ptr.vmem [resolvable:$true] %s34
      %40 = dma.hbm_to_vmem [thread:$0]  %s33, 1536, %s35, [#allocation7], 384, 384, 24
    $region9: #{upsample_cnn_forward.1} parent=1 // pred_fallthru
      _
    // Predicated region
    $region10: #{upsample_cnn_forward.1} parent=1 // pred_check
      _
    $region11: #{upsample_cnn_forward.1} parent=1 // pred_check_branch
      %42 = sbr.rel (0) target = $region13
    $region12: #{upsample_cnn_forward.1} parent=1 // pred_region
      %44 = vsyncadd [#allocation7], 0
      %s45 = sshll.u32 %s2, 4
      %s46 = int_to_ptr.hbm [resolvable:$true] %s45
      %s47 = sshll.u32 [#allocation8], 4
      %s48 = int_to_ptr.vmem [resolvable:$true] %s47
      %53 = dma.hbm_to_vmem [thread:$0]  %s46, 512, %s48, [#allocation7], 128, 128, 8
    $region13: #{upsample_cnn_forward.1} parent=1 // pred_fallthru
      _
    // Predicated region
    $region14: #{upsample_cnn_forward.1} parent=1 // pred_check
      _
    $region15: #{upsample_cnn_forward.1} parent=1 // pred_check_branch
      %55 = sbr.rel (0) target = $region17
    $region16: #{upsample_cnn_forward.1} parent=1 // pred_region
      _
    $region17: #{upsample_cnn_forward.1} parent=1 // pred_fallthru
      _
    // Predicated region
    $region18: #{upsample_cnn_forward.1} parent=1 // pred_check
      _
    $region19: #{upsample_cnn_forward.1} parent=1 // pred_check_branch
      %57 = sbr.rel (0) target = $region21
    $region20: #{upsample_cnn_forward.1} parent=1 // pred_region
      %59 = vsyncadd [#allocation10], 0
      %s60 = sshll.u32 %s4, 4
      %s61 = int_to_ptr.hbm [resolvable:$true] %s60
      %s62 = sshll.u32 [#allocation9], 4
      %s63 = int_to_ptr.vmem [resolvable:$true] %s62
      %68 = dma.hbm_to_vmem [thread:$0]  %s61, 6144, %s63, [#allocation10], 384, 384, 24
    $region21: #{upsample_cnn_forward.1} parent=1 // pred_fallthru
      _
    // Predicated region
    $region22: #{upsample_cnn_forward.1} parent=1 // pred_check
      _
    $region23: #{upsample_cnn_forward.1} parent=1 // pred_check_branch
      %70 = sbr.rel (0) target = $region25
    $region24: #{upsample_cnn_forward.1} parent=1 // pred_region
      %72 = vsyncadd [#allocation10], 0
      %s73 = sshll.u32 %s5, 4
      %s74 = int_to_ptr.hbm [resolvable:$true] %s73
      %s75 = sshll.u32 [#allocation11], 4
      %s76 = int_to_ptr.vmem [resolvable:$true] %s75
      %81 = dma.hbm_to_vmem [thread:$0]  %s74, 1024, %s76, [#allocation10], 128, 128, 8
    $region25: #{upsample_cnn_forward.1} parent=1 // pred_fallthru
      _
    // Predicated region
    $region26: #{upsample_cnn_forward.1} parent=1 // pred_check
      _
    $region27: #{upsample_cnn_forward.1} parent=1 // pred_check_branch
      %83 = sbr.rel (0) target = $region29
    $region28: #{upsample_cnn_forward.1} parent=1 // pred_region
      _
    $region29: #{upsample_cnn_forward.1} parent=1 // pred_fallthru
      _
    // Predicated region
    $region30: #{upsample_cnn_forward.1} parent=1 // pred_check
      _
    $region31: #{upsample_cnn_forward.1} parent=1 // pred_check_branch
      %85 = sbr.rel (0) target = $region33
    $region32: #{upsample_cnn_forward.1} parent=1 // pred_region
      %87 = dma.done [#allocation5], 1024
    $region33: #{upsample_cnn_forward.1} parent=1 // pred_fallthru
      _
    // Predicated region
    $region34: #{upsample_cnn_forward.1} parent=1 // pred_check
      _
    $region35: #{upsample_cnn_forward.1} parent=1 // pred_check_branch
      %89 = sbr.rel (0) target = $region37
    $region36: #{upsample_cnn_forward.1} parent=1 // pred_region
      %91 = dma.done [#allocation7], 1536
    $region37: #{upsample_cnn_forward.1} parent=1 // pred_fallthru
      _
    // Predicated region
    $region38: #{upsample_cnn_forward.1} parent=1 // pred_check
      _
    $region39: #{upsample_cnn_forward.1} parent=1 // pred_check_branch
      %93 = sbr.rel (0) target = $region41
    $region40: #{upsample_cnn_forward.1} parent=1 // pred_region
      %95 = dma.done [#allocation7], 512
    $region41: #{upsample_cnn_forward.1} parent=1 // pred_fallthru
      _
    // Predicated region
    $region42: #{upsample_cnn_forward.1} parent=1 // pred_check
      _
    $region43: #{upsample_cnn_forward.1} parent=1 // pred_check_branch
      %97 = sbr.rel (0) target = $region45
    $region44: #{upsample_cnn_forward.1} parent=1 // pred_region
      %99 = dma.done [#allocation10], 6144
    $region45: #{upsample_cnn_forward.1} parent=1 // pred_fallthru
      _
    // Predicated region
    $region46: #{upsample_cnn_forward.1} parent=1 // pred_check
      _
    $region47: #{upsample_cnn_forward.1} parent=1 // pred_check_branch
      %101 = sbr.rel (0) target = $region49
    $region48: #{upsample_cnn_forward.1} parent=1 // pred_region
      %103 = dma.done [#allocation10], 1024
    $region49: #{upsample_cnn_forward.1} parent=1 // pred_fallthru
      _
    %v104 = vld [vmem:[#allocation4] sm:$0xff]
    %v105 = vld [vmem:[#allocation6] sm:$0xff]
    %v106 = vld [vmem:[#allocation6 + $0x8] sm:$0xff]
    %v107 = vld [vmem:[#allocation6 + $0x10] sm:$0xff]
    %s108 = scalar_lea.vmem [#allocation4], 8
    %v109 = vld [vmem:[%s108] sm:$0xff]
    %s110 = scalar_lea.vmem [#allocation6], 24
    %v111 = vld [vmem:[%s110] sm:$0xff]
    %v112 = vld [vmem:[%s110 + $0x8] sm:$0xff]
    %v113 = vld [vmem:[%s110 + $0x10] sm:$0xff]
    %vm114 = vcmask 64512
    %v116 = vsel %vm114, %v109, 0
    %118 = vmatpush.msra.mxu0 0.0
    %119 = vmatpush.msra.mxu0 0.0
    %120 = vmatpush.msra.mxu0 0.0
    %121 = vmatpush.msra.mxu0 0.0
    %122 = vmatpush.msra.mxu0 0.0
    %123 = vmatpush.msra.mxu0 0.0
    %124 = vmatpush.msra.mxu0 0.0
    %125 = vmatpush.msra.mxu0 0.0
    %126 = vmatpush.msra.mxu0 0.0
    %127 = vmatpush.msra.mxu0 0.0
    %128 = vmatpush.msra.mxu0 0.0
    %129 = vmatpush.msra.mxu0 0.0
    %130 = vmatpush.msra.mxu0 0.0
    %131 = vmatpush.msra.mxu0 0.0
    %132 = vmatpush.msra.mxu0 0.0
    %133 = vmatpush.msra.mxu0 %v111
    %134 = vmatmul.f32.gmra.mxu0 %v116
    %v135 = vpop.f32.mrf.mxu0
    %v136 = vadd.f32 0.0, %v135
    %137 = vdwg.mxu0
    %138 = vmatpush.msra.mxu0 0.0
    %139 = vmatpush.msra.mxu0 0.0
    %140 = vmatpush.msra.mxu0 0.0
    %141 = vmatpush.msra.mxu0 0.0
    %142 = vmatpush.msra.mxu0 0.0
    %143 = vmatpush.msra.mxu0 0.0
    %144 = vmatpush.msra.mxu0 0.0
    %145 = vmatpush.msra.mxu0 0.0
    %146 = vmatpush.msra.mxu0 0.0
    %147 = vmatpush.msra.mxu0 0.0
    %148 = vmatpush.msra.mxu0 0.0
    %149 = vmatpush.msra.mxu0 0.0
    %150 = vmatpush.msra.mxu0 0.0
    %151 = vmatpush.msra.mxu0 0.0
    %152 = vmatpush.msra.mxu0 0.0
    %153 = vmatpush.msra.mxu0 %v112
    %154 = vmatmul.f32.gmra.mxu0 %v116
    %v155 = vpop.f32.mrf.mxu0
    %v156 = vadd.f32 0.0, %v155
    %157 = vdwg.mxu0
    %158 = vmatpush.msra.mxu0 0.0
    %159 = vmatpush.msra.mxu0 0.0
    %160 = vmatpush.msra.mxu0 0.0
    %161 = vmatpush.msra.mxu0 0.0
    %162 = vmatpush.msra.mxu0 0.0
    %163 = vmatpush.msra.mxu0 0.0
    %164 = vmatpush.msra.mxu0 0.0
    %165 = vmatpush.msra.mxu0 0.0
    %166 = vmatpush.msra.mxu0 0.0
    %167 = vmatpush.msra.mxu0 0.0
    %168 = vmatpush.msra.mxu0 0.0
    %169 = vmatpush.msra.mxu0 0.0
    %170 = vmatpush.msra.mxu0 0.0
    %171 = vmatpush.msra.mxu0 0.0
    %172 = vmatpush.msra.mxu0 0.0
    %173 = vmatpush.msra.mxu0 %v113
    %174 = vmatmul.f32.gmra.mxu0 %v116
    %v175 = vpop.f32.mrf.mxu0
    %v176 = vadd.f32 0.0, %v175
    %177 = vdwg.mxu0
    %v179 = vsel %vm114, %v104, 0
    %181 = vmatpush.msra.mxu0 0.0
    %182 = vmatpush.msra.mxu0 0.0
    %183 = vmatpush.msra.mxu0 0.0
    %184 = vmatpush.msra.mxu0 0.0
    %185 = vmatpush.msra.mxu0 0.0
    %186 = vmatpush.msra.mxu0 0.0
    %187 = vmatpush.msra.mxu0 0.0
    %188 = vmatpush.msra.mxu0 0.0
    %189 = vmatpush.msra.mxu0 0.0
    %190 = vmatpush.msra.mxu0 0.0
    %191 = vmatpush.msra.mxu0 0.0
    %192 = vmatpush.msra.mxu0 0.0
    %193 = vmatpush.msra.mxu0 0.0
    %194 = vmatpush.msra.mxu0 0.0
    %195 = vmatpush.msra.mxu0 0.0
    %196 = vmatpush.msra.mxu0 %v105
    %197 = vmatmul.f32.gmra.mxu0 %v179
    %v198 = vpop.f32.mrf.mxu0
    %v199 = vadd.f32 %v136, %v198
    %200 = vdwg.mxu0
    %201 = vmatpush.msra.mxu0 0.0
    %202 = vmatpush.msra.mxu0 0.0
    %203 = vmatpush.msra.mxu0 0.0
    %204 = vmatpush.msra.mxu0 0.0
    %205 = vmatpush.msra.mxu0 0.0
    %206 = vmatpush.msra.mxu0 0.0
    %207 = vmatpush.msra.mxu0 0.0
    %208 = vmatpush.msra.mxu0 0.0
    %209 = vmatpush.msra.mxu0 0.0
    %210 = vmatpush.msra.mxu0 0.0
    %211 = vmatpush.msra.mxu0 0.0
    %212 = vmatpush.msra.mxu0 0.0
    %213 = vmatpush.msra.mxu0 0.0
    %214 = vmatpush.msra.mxu0 0.0
    %215 = vmatpush.msra.mxu0 0.0
    %216 = vmatpush.msra.mxu0 %v106
    %217 = vmatmul.f32.gmra.mxu0 %v179
    %v218 = vpop.f32.mrf.mxu0
    %v219 = vadd.f32 %v156, %v218
    %220 = vdwg.mxu0
    %221 = vmatpush.msra.mxu0 0.0
    %222 = vmatpush.msra.mxu0 0.0
    %223 = vmatpush.msra.mxu0 0.0
    %224 = vmatpush.msra.mxu0 0.0
    %225 = vmatpush.msra.mxu0 0.0
    %226 = vmatpush.msra.mxu0 0.0
    %227 = vmatpush.msra.mxu0 0.0
    %228 = vmatpush.msra.mxu0 0.0
    %229 = vmatpush.msra.mxu0 0.0
    %230 = vmatpush.msra.mxu0 0.0
    %231 = vmatpush.msra.mxu0 0.0
    %232 = vmatpush.msra.mxu0 0.0
    %233 = vmatpush.msra.mxu0 0.0
    %234 = vmatpush.msra.mxu0 0.0
    %235 = vmatpush.msra.mxu0 0.0
    %236 = vmatpush.msra.mxu0 %v107
    %237 = vmatmul.f32.gmra.mxu0 %v179
    %v238 = vpop.f32.mrf.mxu0
    %v239 = vadd.f32 %v176, %v238
    %240 = vdwg.mxu0
    %s241 = scalar_lea.vmem [#allocation4], 16
    %v242 = vld [vmem:[%s241] sm:$0xff]
    %s243 = scalar_lea.vmem [#allocation6], 48
    %v244 = vld [vmem:[%s243] sm:$0xff]
    %v245 = vld [vmem:[%s243 + $0x8] sm:$0xff]
    %v246 = vld [vmem:[%s243 + $0x10] sm:$0xff]
    %v248 = vsel %vm114, %v242, 0
    %250 = vmatpush.msra.mxu0 0.0
    %251 = vmatpush.msra.mxu0 0.0
    %252 = vmatpush.msra.mxu0 0.0
    %253 = vmatpush.msra.mxu0 0.0
    %254 = vmatpush.msra.mxu0 0.0
    %255 = vmatpush.msra.mxu0 0.0
    %256 = vmatpush.msra.mxu0 0.0
    %257 = vmatpush.msra.mxu0 0.0
    %258 = vmatpush.msra.mxu0 0.0
    %259 = vmatpush.msra.mxu0 0.0
    %260 = vmatpush.msra.mxu0 0.0
    %261 = vmatpush.msra.mxu0 0.0
    %262 = vmatpush.msra.mxu0 0.0
    %263 = vmatpush.msra.mxu0 0.0
    %264 = vmatpush.msra.mxu0 0.0
    %265 = vmatpush.msra.mxu0 %v244
    %266 = vmatmul.f32.gmra.mxu0 %v248
    %v267 = vpop.f32.mrf.mxu0
    %v268 = vadd.f32 0.0, %v267
    %269 = vdwg.mxu0
    %270 = vmatpush.msra.mxu0 0.0
    %271 = vmatpush.msra.mxu0 0.0
    %272 = vmatpush.msra.mxu0 0.0
    %273 = vmatpush.msra.mxu0 0.0
    %274 = vmatpush.msra.mxu0 0.0
    %275 = vmatpush.msra.mxu0 0.0
    %276 = vmatpush.msra.mxu0 0.0
    %277 = vmatpush.msra.mxu0 0.0
    %278 = vmatpush.msra.mxu0 0.0
    %279 = vmatpush.msra.mxu0 0.0
    %280 = vmatpush.msra.mxu0 0.0
    %281 = vmatpush.msra.mxu0 0.0
    %282 = vmatpush.msra.mxu0 0.0
    %283 = vmatpush.msra.mxu0 0.0
    %284 = vmatpush.msra.mxu0 0.0
    %285 = vmatpush.msra.mxu0 %v245
    %286 = vmatmul.f32.gmra.mxu0 %v248
    %v287 = vpop.f32.mrf.mxu0
    %v288 = vadd.f32 0.0, %v287
    %289 = vdwg.mxu0
    %290 = vmatpush.msra.mxu0 0.0
    %291 = vmatpush.msra.mxu0 0.0
    %292 = vmatpush.msra.mxu0 0.0
    %293 = vmatpush.msra.mxu0 0.0
    %294 = vmatpush.msra.mxu0 0.0
    %295 = vmatpush.msra.mxu0 0.0
    %296 = vmatpush.msra.mxu0 0.0
    %297 = vmatpush.msra.mxu0 0.0
    %298 = vmatpush.msra.mxu0 0.0
    %299 = vmatpush.msra.mxu0 0.0
    %300 = vmatpush.msra.mxu0 0.0
    %301 = vmatpush.msra.mxu0 0.0
    %302 = vmatpush.msra.mxu0 0.0
    %303 = vmatpush.msra.mxu0 0.0
    %304 = vmatpush.msra.mxu0 0.0
    %305 = vmatpush.msra.mxu0 %v246
    %306 = vmatmul.f32.gmra.mxu0 %v248
    %v307 = vpop.f32.mrf.mxu0
    %v308 = vadd.f32 0.0, %v307
    %309 = vdwg.mxu0
    %v310 = vadd.f32 %v199, %v268
    %v311 = vadd.f32 %v219, %v288
    %v312 = vadd.f32 %v239, %v308
    %s313 = scalar_lea.vmem [#allocation4], 24
    %v314 = vld [vmem:[%s313] sm:$0xff]
    %s315 = scalar_lea.vmem [#allocation6], 72
    %v316 = vld [vmem:[%s315] sm:$0xff]
    %v317 = vld [vmem:[%s315 + $0x8] sm:$0xff]
    %v318 = vld [vmem:[%s315 + $0x10] sm:$0xff]
    %v320 = vsel %vm114, %v314, 0
    %322 = vmatpush.msra.mxu0 0.0
    %323 = vmatpush.msra.mxu0 0.0
    %324 = vmatpush.msra.mxu0 0.0
    %325 = vmatpush.msra.mxu0 0.0
    %326 = vmatpush.msra.mxu0 0.0
    %327 = vmatpush.msra.mxu0 0.0
    %328 = vmatpush.msra.mxu0 0.0
    %329 = vmatpush.msra.mxu0 0.0
    %330 = vmatpush.msra.mxu0 0.0
    %331 = vmatpush.msra.mxu0 0.0
    %332 = vmatpush.msra.mxu0 0.0
    %333 = vmatpush.msra.mxu0 0.0
    %334 = vmatpush.msra.mxu0 0.0
    %335 = vmatpush.msra.mxu0 0.0
    %336 = vmatpush.msra.mxu0 0.0
    %337 = vmatpush.msra.mxu0 %v316
    %338 = vmatmul.f32.gmra.mxu0 %v320
    %v339 = vpop.f32.mrf.mxu0
    %v340 = vadd.f32 0.0, %v339
    %341 = vdwg.mxu0
    %342 = vmatpush.msra.mxu0 0.0
    %343 = vmatpush.msra.mxu0 0.0
    %344 = vmatpush.msra.mxu0 0.0
    %345 = vmatpush.msra.mxu0 0.0
    %346 = vmatpush.msra.mxu0 0.0
    %347 = vmatpush.msra.mxu0 0.0
    %348 = vmatpush.msra.mxu0 0.0
    %349 = vmatpush.msra.mxu0 0.0
    %350 = vmatpush.msra.mxu0 0.0
    %351 = vmatpush.msra.mxu0 0.0
    %352 = vmatpush.msra.mxu0 0.0
    %353 = vmatpush.msra.mxu0 0.0
    %354 = vmatpush.msra.mxu0 0.0
    %355 = vmatpush.msra.mxu0 0.0
    %356 = vmatpush.msra.mxu0 0.0
    %357 = vmatpush.msra.mxu0 %v317
    %358 = vmatmul.f32.gmra.mxu0 %v320
    %v359 = vpop.f32.mrf.mxu0
    %v360 = vadd.f32 0.0, %v359
    %361 = vdwg.mxu0
    %362 = vmatpush.msra.mxu0 0.0
    %363 = vmatpush.msra.mxu0 0.0
    %364 = vmatpush.msra.mxu0 0.0
    %365 = vmatpush.msra.mxu0 0.0
    %366 = vmatpush.msra.mxu0 0.0
    %367 = vmatpush.msra.mxu0 0.0
    %368 = vmatpush.msra.mxu0 0.0
    %369 = vmatpush.msra.mxu0 0.0
    %370 = vmatpush.msra.mxu0 0.0
    %371 = vmatpush.msra.mxu0 0.0
    %372 = vmatpush.msra.mxu0 0.0
    %373 = vmatpush.msra.mxu0 0.0
    %374 = vmatpush.msra.mxu0 0.0
    %375 = vmatpush.msra.mxu0 0.0
    %376 = vmatpush.msra.mxu0 0.0
    %377 = vmatpush.msra.mxu0 %v318
    %378 = vmatmul.f32.gmra.mxu0 %v320
    %v379 = vpop.f32.mrf.mxu0
    %v380 = vadd.f32 0.0, %v379
    %381 = vdwg.mxu0
    %v382 = vadd.f32 %v310, %v340
    %v383 = vadd.f32 %v311, %v360
    %v384 = vadd.f32 %v312, %v380
    %385 = vst [vmem:[#allocation2] sm:$0xff] %v382
    %386 = vst [vmem:[#allocation2 + $0x10] sm:$0xff] %v383
    %387 = vst [vmem:[#allocation2 + $0x20] sm:$0xff] %v384
    %s388 = scalar_lea.vmem [#allocation4], 32
    %v389 = vld [vmem:[%s388] sm:$0xff]
    %v390 = vld [vmem:[#allocation6] sm:$0xff]
    %v391 = vld [vmem:[#allocation6 + $0x8] sm:$0xff]
    %v392 = vld [vmem:[#allocation6 + $0x10] sm:$0xff]
    %s393 = scalar_lea.vmem [#allocation4], 40
    %v394 = vld [vmem:[%s393] sm:$0xff]
    %v395 = vld [vmem:[%s110] sm:$0xff]
    %v396 = vld [vmem:[%s110 + $0x8] sm:$0xff]
    %v397 = vld [vmem:[%s110 + $0x10] sm:$0xff]
    %v399 = vsel %vm114, %v394, 0
    %401 = vmatpush.msra.mxu0 0.0
    %402 = vmatpush.msra.mxu0 0.0
    %403 = vmatpush.msra.mxu0 0.0
    %404 = vmatpush.msra.mxu0 0.0
    %405 = vmatpush.msra.mxu0 0.0
    %406 = vmatpush.msra.mxu0 0.0
    %407 = vmatpush.msra.mxu0 0.0
    %408 = vmatpush.msra.mxu0 0.0
    %409 = vmatpush.msra.mxu0 0.0
    %410 = vmatpush.msra.mxu0 0.0
    %411 = vmatpush.msra.mxu0 0.0
    %412 = vmatpush.msra.mxu0 0.0
    %413 = vmatpush.msra.mxu0 0.0
    %414 = vmatpush.msra.mxu0 0.0
    %415 = vmatpush.msra.mxu0 0.0
    %416 = vmatpush.msra.mxu0 %v395
    %417 = vmatmul.f32.gmra.mxu0 %v399
    %v418 = vpop.f32.mrf.mxu0
    %v419 = vadd.f32 0.0, %v418
    %420 = vdwg.mxu0
    %421 = vmatpush.msra.mxu0 0.0
    %422 = vmatpush.msra.mxu0 0.0
    %423 = vmatpush.msra.mxu0 0.0
    %424 = vmatpush.msra.mxu0 0.0
    %425 = vmatpush.msra.mxu0 0.0
    %426 = vmatpush.msra.mxu0 0.0
    %427 = vmatpush.msra.mxu0 0.0
    %428 = vmatpush.msra.mxu0 0.0
    %429 = vmatpush.msra.mxu0 0.0
    %430 = vmatpush.msra.mxu0 0.0
    %431 = vmatpush.msra.mxu0 0.0
    %432 = vmatpush.msra.mxu0 0.0
    %433 = vmatpush.msra.mxu0 0.0
    %434 = vmatpush.msra.mxu0 0.0
    %435 = vmatpush.msra.mxu0 0.0
    %436 = vmatpush.msra.mxu0 %v396
    %437 = vmatmul.f32.gmra.mxu0 %v399
    %v438 = vpop.f32.mrf.mxu0
    %v439 = vadd.f32 0.0, %v438
    %440 = vdwg.mxu0
    %441 = vmatpush.msra.mxu0 0.0
    %442 = vmatpush.msra.mxu0 0.0
    %443 = vmatpush.msra.mxu0 0.0
    %444 = vmatpush.msra.mxu0 0.0
    %445 = vmatpush.msra.mxu0 0.0
    %446 = vmatpush.msra.mxu0 0.0
    %447 = vmatpush.msra.mxu0 0.0
    %448 = vmatpush.msra.mxu0 0.0
    %449 = vmatpush.msra.mxu0 0.0
    %450 = vmatpush.msra.mxu0 0.0
    %451 = vmatpush.msra.mxu0 0.0
    %452 = vmatpush.msra.mxu0 0.0
    %453 = vmatpush.msra.mxu0 0.0
    %454 = vmatpush.msra.mxu0 0.0
    %455 = vmatpush.msra.mxu0 0.0
    %456 = vmatpush.msra.mxu0 %v397
    %457 = vmatmul.f32.gmra.mxu0 %v399
    %v458 = vpop.f32.mrf.mxu0
    %v459 = vadd.f32 0.0, %v458
    %460 = vdwg.mxu0
    %v462 = vsel %vm114, %v389, 0
    %464 = vmatpush.msra.mxu0 0.0
    %465 = vmatpush.msra.mxu0 0.0
    %466 = vmatpush.msra.mxu0 0.0
    %467 = vmatpush.msra.mxu0 0.0
    %468 = vmatpush.msra.mxu0 0.0
    %469 = vmatpush.msra.mxu0 0.0
    %470 = vmatpush.msra.mxu0 0.0
    %471 = vmatpush.msra.mxu0 0.0
    %472 = vmatpush.msra.mxu0 0.0
    %473 = vmatpush.msra.mxu0 0.0
    %474 = vmatpush.msra.mxu0 0.0
    %475 = vmatpush.msra.mxu0 0.0
    %476 = vmatpush.msra.mxu0 0.0
    %477 = vmatpush.msra.mxu0 0.0
    %478 = vmatpush.msra.mxu0 0.0
    %479 = vmatpush.msra.mxu0 %v390
    %480 = vmatmul.f32.gmra.mxu0 %v462
    %v481 = vpop.f32.mrf.mxu0
    %v482 = vadd.f32 %v419, %v481
    %483 = vdwg.mxu0
    %484 = vmatpush.msra.mxu0 0.0
    %485 = vmatpush.msra.mxu0 0.0
    %486 = vmatpush.msra.mxu0 0.0
    %487 = vmatpush.msra.mxu0 0.0
    %488 = vmatpush.msra.mxu0 0.0
    %489 = vmatpush.msra.mxu0 0.0
    %490 = vmatpush.msra.mxu0 0.0
    %491 = vmatpush.msra.mxu0 0.0
    %492 = vmatpush.msra.mxu0 0.0
    %493 = vmatpush.msra.mxu0 0.0
    %494 = vmatpush.msra.mxu0 0.0
    %495 = vmatpush.msra.mxu0 0.0
    %496 = vmatpush.msra.mxu0 0.0
    %497 = vmatpush.msra.mxu0 0.0
    %498 = vmatpush.msra.mxu0 0.0
    %499 = vmatpush.msra.mxu0 %v391
    %500 = vmatmul.f32.gmra.mxu0 %v462
    %v501 = vpop.f32.mrf.mxu0
    %v502 = vadd.f32 %v439, %v501
    %503 = vdwg.mxu0
    %504 = vmatpush.msra.mxu0 0.0
    %505 = vmatpush.msra.mxu0 0.0
    %506 = vmatpush.msra.mxu0 0.0
    %507 = vmatpush.msra.mxu0 0.0
    %508 = vmatpush.msra.mxu0 0.0
    %509 = vmatpush.msra.mxu0 0.0
    %510 = vmatpush.msra.mxu0 0.0
    %511 = vmatpush.msra.mxu0 0.0
    %512 = vmatpush.msra.mxu0 0.0
    %513 = vmatpush.msra.mxu0 0.0
    %514 = vmatpush.msra.mxu0 0.0
    %515 = vmatpush.msra.mxu0 0.0
    %516 = vmatpush.msra.mxu0 0.0
    %517 = vmatpush.msra.mxu0 0.0
    %518 = vmatpush.msra.mxu0 0.0
    %519 = vmatpush.msra.mxu0 %v392
    %520 = vmatmul.f32.gmra.mxu0 %v462
    %v521 = vpop.f32.mrf.mxu0
    %v522 = vadd.f32 %v459, %v521
    %523 = vdwg.mxu0
    %s524 = scalar_lea.vmem [#allocation4], 48
    %v525 = vld [vmem:[%s524] sm:$0xff]
    %v526 = vld [vmem:[%s243] sm:$0xff]
    %v527 = vld [vmem:[%s243 + $0x8] sm:$0xff]
    %v528 = vld [vmem:[%s243 + $0x10] sm:$0xff]
    %v530 = vsel %vm114, %v525, 0
    %532 = vmatpush.msra.mxu0 0.0
    %533 = vmatpush.msra.mxu0 0.0
    %534 = vmatpush.msra.mxu0 0.0
    %535 = vmatpush.msra.mxu0 0.0
    %536 = vmatpush.msra.mxu0 0.0
    %537 = vmatpush.msra.mxu0 0.0
    %538 = vmatpush.msra.mxu0 0.0
    %539 = vmatpush.msra.mxu0 0.0
    %540 = vmatpush.msra.mxu0 0.0
    %541 = vmatpush.msra.mxu0 0.0
    %542 = vmatpush.msra.mxu0 0.0
    %543 = vmatpush.msra.mxu0 0.0
    %544 = vmatpush.msra.mxu0 0.0
    %545 = vmatpush.msra.mxu0 0.0
    %546 = vmatpush.msra.mxu0 0.0
    %547 = vmatpush.msra.mxu0 %v526
    %548 = vmatmul.f32.gmra.mxu0 %v530
    %v549 = vpop.f32.mrf.mxu0
    %v550 = vadd.f32 0.0, %v549
    %551 = vdwg.mxu0
    %552 = vmatpush.msra.mxu0 0.0
    %553 = vmatpush.msra.mxu0 0.0
    %554 = vmatpush.msra.mxu0 0.0
    %555 = vmatpush.msra.mxu0 0.0
    %556 = vmatpush.msra.mxu0 0.0
    %557 = vmatpush.msra.mxu0 0.0
    %558 = vmatpush.msra.mxu0 0.0
    %559 = vmatpush.msra.mxu0 0.0
    %560 = vmatpush.msra.mxu0 0.0
    %561 = vmatpush.msra.mxu0 0.0
    %562 = vmatpush.msra.mxu0 0.0
    %563 = vmatpush.msra.mxu0 0.0
    %564 = vmatpush.msra.mxu0 0.0
    %565 = vmatpush.msra.mxu0 0.0
    %566 = vmatpush.msra.mxu0 0.0
    %567 = vmatpush.msra.mxu0 %v527
    %568 = vmatmul.f32.gmra.mxu0 %v530
    %v569 = vpop.f32.mrf.mxu0
    %v570 = vadd.f32 0.0, %v569
    %571 = vdwg.mxu0
    %572 = vmatpush.msra.mxu0 0.0
    %573 = vmatpush.msra.mxu0 0.0
    %574 = vmatpush.msra.mxu0 0.0
    %575 = vmatpush.msra.mxu0 0.0
    %576 = vmatpush.msra.mxu0 0.0
    %577 = vmatpush.msra.mxu0 0.0
    %578 = vmatpush.msra.mxu0 0.0
    %579 = vmatpush.msra.mxu0 0.0
    %580 = vmatpush.msra.mxu0 0.0
    %581 = vmatpush.msra.mxu0 0.0
    %582 = vmatpush.msra.mxu0 0.0
    %583 = vmatpush.msra.mxu0 0.0
    %584 = vmatpush.msra.mxu0 0.0
    %585 = vmatpush.msra.mxu0 0.0
    %586 = vmatpush.msra.mxu0 0.0
    %587 = vmatpush.msra.mxu0 %v528
    %588 = vmatmul.f32.gmra.mxu0 %v530
    %v589 = vpop.f32.mrf.mxu0
    %v590 = vadd.f32 0.0, %v589
    %591 = vdwg.mxu0
    %v592 = vadd.f32 %v482, %v550
    %v593 = vadd.f32 %v502, %v570
    %v594 = vadd.f32 %v522, %v590
    %s595 = scalar_lea.vmem [#allocation4], 56
    %v596 = vld [vmem:[%s595] sm:$0xff]
    %v597 = vld [vmem:[%s315] sm:$0xff]
    %v598 = vld [vmem:[%s315 + $0x8] sm:$0xff]
    %v599 = vld [vmem:[%s315 + $0x10] sm:$0xff]
    %v601 = vsel %vm114, %v596, 0
    %603 = vmatpush.msra.mxu0 0.0
    %604 = vmatpush.msra.mxu0 0.0
    %605 = vmatpush.msra.mxu0 0.0
    %606 = vmatpush.msra.mxu0 0.0
    %607 = vmatpush.msra.mxu0 0.0
    %608 = vmatpush.msra.mxu0 0.0
    %609 = vmatpush.msra.mxu0 0.0
    %610 = vmatpush.msra.mxu0 0.0
    %611 = vmatpush.msra.mxu0 0.0
    %612 = vmatpush.msra.mxu0 0.0
    %613 = vmatpush.msra.mxu0 0.0
    %614 = vmatpush.msra.mxu0 0.0
    %615 = vmatpush.msra.mxu0 0.0
    %616 = vmatpush.msra.mxu0 0.0
    %617 = vmatpush.msra.mxu0 0.0
    %618 = vmatpush.msra.mxu0 %v597
    %619 = vmatmul.f32.gmra.mxu0 %v601
    %v620 = vpop.f32.mrf.mxu0
    %v621 = vadd.f32 0.0, %v620
    %622 = vdwg.mxu0
    %623 = vmatpush.msra.mxu0 0.0
    %624 = vmatpush.msra.mxu0 0.0
    %625 = vmatpush.msra.mxu0 0.0
    %626 = vmatpush.msra.mxu0 0.0
    %627 = vmatpush.msra.mxu0 0.0
    %628 = vmatpush.msra.mxu0 0.0
    %629 = vmatpush.msra.mxu0 0.0
    %630 = vmatpush.msra.mxu0 0.0
    %631 = vmatpush.msra.mxu0 0.0
    %632 = vmatpush.msra.mxu0 0.0
    %633 = vmatpush.msra.mxu0 0.0
    %634 = vmatpush.msra.mxu0 0.0
    %635 = vmatpush.msra.mxu0 0.0
    %636 = vmatpush.msra.mxu0 0.0
    %637 = vmatpush.msra.mxu0 0.0
    %638 = vmatpush.msra.mxu0 %v598
    %639 = vmatmul.f32.gmra.mxu0 %v601
    %v640 = vpop.f32.mrf.mxu0
    %v641 = vadd.f32 0.0, %v640
    %642 = vdwg.mxu0
    %643 = vmatpush.msra.mxu0 0.0
    %644 = vmatpush.msra.mxu0 0.0
    %645 = vmatpush.msra.mxu0 0.0
    %646 = vmatpush.msra.mxu0 0.0
    %647 = vmatpush.msra.mxu0 0.0
    %648 = vmatpush.msra.mxu0 0.0
    %649 = vmatpush.msra.mxu0 0.0
    %650 = vmatpush.msra.mxu0 0.0
    %651 = vmatpush.msra.mxu0 0.0
    %652 = vmatpush.msra.mxu0 0.0
    %653 = vmatpush.msra.mxu0 0.0
    %654 = vmatpush.msra.mxu0 0.0
    %655 = vmatpush.msra.mxu0 0.0
    %656 = vmatpush.msra.mxu0 0.0
    %657 = vmatpush.msra.mxu0 0.0
    %658 = vmatpush.msra.mxu0 %v599
    %659 = vmatmul.f32.gmra.mxu0 %v601
    %v660 = vpop.f32.mrf.mxu0
    %v661 = vadd.f32 0.0, %v660
    %662 = vdwg.mxu0
    %v663 = vadd.f32 %v592, %v621
    %v664 = vadd.f32 %v593, %v641
    %v665 = vadd.f32 %v594, %v661
    %666 = vst [vmem:[#allocation2 + $0x8] sm:$0xff] %v663
    %667 = vst [vmem:[#allocation2 + $0x18] sm:$0xff] %v664
    %668 = vst [vmem:[#allocation2 + $0x28] sm:$0xff] %v665
    %v669 = vld [vmem:[#allocation8] sm:$0xff]
    %v670 = vld [vmem:[#allocation8 + $0x8] sm:$0xff]
    %v671 = vld [vmem:[#allocation8 + $0x10] sm:$0xff]
    %v672 = vld [vmem:[#allocation8 + $0x18] sm:$0xff]
    %v673 = vld [vmem:[#allocation2] sm:$0xff]
    %v674 = vld [vmem:[#allocation2 + $0x8] sm:$0xff]
    %v675 = vld [vmem:[#allocation2 + $0x10] sm:$0xff]
    %v676 = vld [vmem:[#allocation2 + $0x18] sm:$0xff]
    %v677 = vld [vmem:[#allocation2 + $0x20] sm:$0xff]
    %v678 = vld [vmem:[#allocation2 + $0x28] sm:$0xff]
    %v679 = vld [vmem:[%s3] sm:$0x1]
    %v681 = vperm.slane %v679, 0
    %vm683 = vcmask 392192
    %v685 = vsel %vm683, %v669, 0
    %v688 = vsel %vm683, %v670, 0
    %v691 = vsel %vm683, %v671, 0
    %v694 = vsel %vm683, %v672, 0
    %696 = vmatpush.msra.mxu0 0.0
    %697 = vmatpush.msra.mxu0 0.0
    %698 = vmatpush.msra.mxu0 0.0
    %699 = vmatpush.msra.mxu0 0.0
    %700 = vmatpush.msra.mxu0 0.0
    %701 = vmatpush.msra.mxu0 0.0
    %702 = vmatpush.msra.mxu0 0.0
    %703 = vmatpush.msra.mxu0 0.0
    %704 = vmatpush.msra.mxu0 0.0
    %705 = vmatpush.msra.mxu0 0.0
    %706 = vmatpush.msra.mxu0 %v678
    %707 = vmatpush.msra.mxu0 %v677
    %708 = vmatpush.msra.mxu0 %v676
    %709 = vmatpush.msra.mxu0 %v675
    %710 = vmatpush.msra.mxu0 %v674
    %711 = vmatpush.msra.mxu0 %v673
    %712 = vmatmul.f32.gmra.mxu0 %v685
    %v713 = vpop.f32.mrf.mxu0
    %v714 = vadd.f32 %v681, %v713
    %715 = vmatmul.f32.gmra.mxu0 %v688
    %v716 = vpop.f32.mrf.mxu0
    %v717 = vadd.f32 %v681, %v716
    %718 = vmatmul.f32.gmra.mxu0 %v691
    %v719 = vpop.f32.mrf.mxu0
    %v720 = vadd.f32 %v681, %v719
    %721 = vmatmul.f32.gmra.mxu0 %v694
    %v722 = vpop.f32.mrf.mxu0
    %v723 = vadd.f32 %v681, %v722
    %724 = vdwg.mxu0
    %v725 = vmax.f32 %v714, 0.0
    %v726 = vmax.f32 %v717, 0.0
    %v727 = vmax.f32 %v720, 0.0
    %v728 = vmax.f32 %v723, 0.0
    %v729 = vld [vmem:[#allocation9] sm:$0xff]
    %v730 = vld [vmem:[#allocation9 + $0x8] sm:$0xff]
    %v731 = vld [vmem:[#allocation9 + $0x10] sm:$0xff]
    %v732 = vld [vmem:[#allocation9 + $0x18] sm:$0xff]
    %v733 = vld [vmem:[#allocation9 + $0x20] sm:$0xff]
    %v734 = vld [vmem:[#allocation9 + $0x28] sm:$0xff]
    %v735 = vld [vmem:[#allocation9 + $0x30] sm:$0xff]
    %v736 = vld [vmem:[#allocation9 + $0x38] sm:$0xff]
    %v737 = vld [vmem:[#allocation9 + $0x40] sm:$0xff]
    %v738 = vld [vmem:[#allocation9 + $0x48] sm:$0xff]
    %v739 = vld [vmem:[#allocation9 + $0x50] sm:$0xff]
    %v740 = vld [vmem:[#allocation9 + $0x58] sm:$0xff]
    %v741 = vld [vmem:[#allocation9 + $0x60] sm:$0xff]
    %v742 = vld [vmem:[#allocation9 + $0x68] sm:$0xff]
    %v743 = vld [vmem:[#allocation9 + $0x70] sm:$0xff]
    %v744 = vld [vmem:[#allocation9 + $0x78] sm:$0xff]
    %v745 = vld [vmem:[#allocation9 + $0x80] sm:$0xff]
    %v746 = vld [vmem:[#allocation9 + $0x88] sm:$0xff]
    %v747 = vld [vmem:[#allocation9 + $0x90] sm:$0xff]
    %v748 = vld [vmem:[#allocation9 + $0x98] sm:$0xff]
    %v749 = vld [vmem:[#allocation9 + $0xa0] sm:$0xff]
    %v750 = vld [vmem:[#allocation9 + $0xa8] sm:$0xff]
    %v751 = vld [vmem:[#allocation9 + $0xb0] sm:$0xff]
    %v752 = vld [vmem:[#allocation9 + $0xb8] sm:$0xff]
    %v753 = vld [vmem:[#allocation9 + $0xc0] sm:$0xff]
    %v754 = vld [vmem:[#allocation9 + $0xc8] sm:$0xff]
    %v755 = vld [vmem:[#allocation9 + $0xd0] sm:$0xff]
    %v756 = vld [vmem:[#allocation9 + $0xd8] sm:$0xff]
    %v757 = vld [vmem:[#allocation9 + $0xe0] sm:$0xff]
    %v758 = vld [vmem:[#allocation9 + $0xe8] sm:$0xff]
    %v759 = vld [vmem:[#allocation9 + $0xf0] sm:$0xff]
    %v760 = vld [vmem:[#allocation9 + $0xf8] sm:$0xff]
    %v761 = vld [vmem:[#allocation9 + $0x100] sm:$0xff]
    %v762 = vld [vmem:[#allocation9 + $0x108] sm:$0xff]
    %v763 = vld [vmem:[#allocation9 + $0x110] sm:$0xff]
    %v764 = vld [vmem:[#allocation9 + $0x118] sm:$0xff]
    %v765 = vld [vmem:[#allocation9 + $0x120] sm:$0xff]
    %v766 = vld [vmem:[#allocation9 + $0x128] sm:$0xff]
    %v767 = vld [vmem:[#allocation9 + $0x130] sm:$0xff]
    %v768 = vld [vmem:[#allocation9 + $0x138] sm:$0xff]
    %v769 = vld [vmem:[#allocation9 + $0x140] sm:$0xff]
    %v770 = vld [vmem:[#allocation9 + $0x148] sm:$0xff]
    %v771 = vld [vmem:[#allocation9 + $0x150] sm:$0xff]
    %v772 = vld [vmem:[#allocation9 + $0x158] sm:$0xff]
    %v773 = vld [vmem:[#allocation9 + $0x160] sm:$0xff]
    %v774 = vld [vmem:[#allocation9 + $0x168] sm:$0xff]
    %v775 = vld [vmem:[#allocation9 + $0x170] sm:$0xff]
    %v776 = vld [vmem:[#allocation9 + $0x178] sm:$0xff]
    %777 = vmatpush.msra.mxu0 %v774
    %778 = vmatpush.msra.mxu0 %v771
    %779 = vmatpush.msra.mxu0 %v768
    %780 = vmatpush.msra.mxu0 %v765
    %781 = vmatpush.msra.mxu0 %v762
    %782 = vmatpush.msra.mxu0 %v759
    %783 = vmatpush.msra.mxu0 %v756
    %784 = vmatpush.msra.mxu0 %v753
    %785 = vmatpush.msra.mxu0 %v750
    %786 = vmatpush.msra.mxu0 %v747
    %787 = vmatpush.msra.mxu0 %v744
    %788 = vmatpush.msra.mxu0 %v741
    %789 = vmatpush.msra.mxu0 %v738
    %790 = vmatpush.msra.mxu0 %v735
    %791 = vmatpush.msra.mxu0 %v732
    %792 = vmatpush.msra.mxu0 %v729
    %793 = vmatmul.f32.gmra.mxu0 %v725
    %v794 = vpop.f32.mrf.mxu0
    %v795 = vadd.f32 0.0, %v794
    %796 = vmatmul.f32.gmra.mxu0 %v726
    %v797 = vpop.f32.mrf.mxu0
    %v798 = vadd.f32 0.0, %v797
    %799 = vmatmul.f32.gmra.mxu0 %v727
    %v800 = vpop.f32.mrf.mxu0
    %v801 = vadd.f32 0.0, %v800
    %802 = vmatmul.f32.gmra.mxu0 %v728
    %v803 = vpop.f32.mrf.mxu0
    %v804 = vadd.f32 0.0, %v803
    %805 = vdwg.mxu0
    %806 = vmatpush.msra.mxu0 %v775
    %807 = vmatpush.msra.mxu0 %v772
    %808 = vmatpush.msra.mxu0 %v769
    %809 = vmatpush.msra.mxu0 %v766
    %810 = vmatpush.msra.mxu0 %v763
    %811 = vmatpush.msra.mxu0 %v760
    %812 = vmatpush.msra.mxu0 %v757
    %813 = vmatpush.msra.mxu0 %v754
    %814 = vmatpush.msra.mxu0 %v751
    %815 = vmatpush.msra.mxu0 %v748
    %816 = vmatpush.msra.mxu0 %v745
    %817 = vmatpush.msra.mxu0 %v742
    %818 = vmatpush.msra.mxu0 %v739
    %819 = vmatpush.msra.mxu0 %v736
    %820 = vmatpush.msra.mxu0 %v733
    %821 = vmatpush.msra.mxu0 %v730
    %822 = vmatmul.f32.gmra.mxu0 %v725
    %v823 = vpop.f32.mrf.mxu0
    %v824 = vadd.f32 0.0, %v823
    %825 = vmatmul.f32.gmra.mxu0 %v726
    %v826 = vpop.f32.mrf.mxu0
    %v827 = vadd.f32 0.0, %v826
    %828 = vmatmul.f32.gmra.mxu0 %v727
    %v829 = vpop.f32.mrf.mxu0
    %v830 = vadd.f32 0.0, %v829
    %831 = vmatmul.f32.gmra.mxu0 %v728
    %v832 = vpop.f32.mrf.mxu0
    %v833 = vadd.f32 0.0, %v832
    %834 = vdwg.mxu0
    %835 = vmatpush.msra.mxu0 %v776
    %836 = vmatpush.msra.mxu0 %v773
    %837 = vmatpush.msra.mxu0 %v770
    %838 = vmatpush.msra.mxu0 %v767
    %839 = vmatpush.msra.mxu0 %v764
    %840 = vmatpush.msra.mxu0 %v761
    %841 = vmatpush.msra.mxu0 %v758
    %842 = vmatpush.msra.mxu0 %v755
    %843 = vmatpush.msra.mxu0 %v752
    %844 = vmatpush.msra.mxu0 %v749
    %845 = vmatpush.msra.mxu0 %v746
    %846 = vmatpush.msra.mxu0 %v743
    %847 = vmatpush.msra.mxu0 %v740
    %848 = vmatpush.msra.mxu0 %v737
    %849 = vmatpush.msra.mxu0 %v734
    %850 = vmatpush.msra.mxu0 %v731
    %851 = vmatmul.f32.gmra.mxu0 %v725
    %v852 = vpop.f32.mrf.mxu0
    %v853 = vadd.f32 0.0, %v852
    %854 = vmatmul.f32.gmra.mxu0 %v726
    %v855 = vpop.f32.mrf.mxu0
    %v856 = vadd.f32 0.0, %v855
    %857 = vmatmul.f32.gmra.mxu0 %v727
    %v858 = vpop.f32.mrf.mxu0
    %v859 = vadd.f32 0.0, %v858
    %860 = vmatmul.f32.gmra.mxu0 %v728
    %v861 = vpop.f32.mrf.mxu0
    %v862 = vadd.f32 0.0, %v861
    %863 = vdwg.mxu0
    %864 = vst [vmem:[#allocation3] sm:$0xff] %v795
    %865 = vst [vmem:[#allocation3 + $0x8] sm:$0xff] %v798
    %866 = vst [vmem:[#allocation3 + $0x10] sm:$0xff] %v801
    %867 = vst [vmem:[#allocation3 + $0x18] sm:$0xff] %v804
    %868 = vst [vmem:[#allocation3 + $0x20] sm:$0xff] %v824
    %869 = vst [vmem:[#allocation3 + $0x28] sm:$0xff] %v827
    %870 = vst [vmem:[#allocation3 + $0x30] sm:$0xff] %v830
    %871 = vst [vmem:[#allocation3 + $0x38] sm:$0xff] %v833
    %872 = vst [vmem:[#allocation3 + $0x40] sm:$0xff] %v853
    %873 = vst [vmem:[#allocation3 + $0x48] sm:$0xff] %v856
    %874 = vst [vmem:[#allocation3 + $0x50] sm:$0xff] %v859
    %875 = vst [vmem:[#allocation3 + $0x58] sm:$0xff] %v862
    %v876 = vld [vmem:[#allocation11] sm:$0xff]
    %v877 = vld [vmem:[#allocation11 + $0x8] sm:$0xff]
    %v878 = vld [vmem:[#allocation11 + $0x10] sm:$0xff]
    %v879 = vld [vmem:[#allocation11 + $0x18] sm:$0xff]
    %v880 = vld [vmem:[#allocation11 + $0x20] sm:$0xff]
    %v881 = vld [vmem:[#allocation11 + $0x28] sm:$0xff]
    %v882 = vld [vmem:[#allocation11 + $0x30] sm:$0xff]
    %v883 = vld [vmem:[#allocation11 + $0x38] sm:$0xff]
    %v884 = vld [vmem:[#allocation3] sm:$0xff]
    %v885 = vld [vmem:[#allocation3 + $0x8] sm:$0xff]
    %v886 = vld [vmem:[#allocation3 + $0x10] sm:$0xff]
    %v887 = vld [vmem:[#allocation3 + $0x18] sm:$0xff]
    %v888 = vld [vmem:[#allocation3 + $0x20] sm:$0xff]
    %v889 = vld [vmem:[#allocation3 + $0x28] sm:$0xff]
    %v890 = vld [vmem:[#allocation3 + $0x30] sm:$0xff]
    %v891 = vld [vmem:[#allocation3 + $0x38] sm:$0xff]
    %v892 = vld [vmem:[#allocation3 + $0x40] sm:$0xff]
    %v893 = vld [vmem:[#allocation3 + $0x48] sm:$0xff]
    %v894 = vld [vmem:[#allocation3 + $0x50] sm:$0xff]
    %v895 = vld [vmem:[#allocation3 + $0x58] sm:$0xff]
    %v896 = vld [vmem:[%s6] sm:$0x1]
    %v898 = vperm.slane %v896, 0
    %vm900 = vcmask 785408
    %v902 = vsel %vm900, %v876, 0
    %v905 = vsel %vm900, %v877, 0
    %v908 = vsel %vm900, %v878, 0
    %v911 = vsel %vm900, %v879, 0
    %v914 = vsel %vm900, %v880, 0
    %v917 = vsel %vm900, %v881, 0
    %v920 = vsel %vm900, %v882, 0
    %v923 = vsel %vm900, %v883, 0
    %925 = vmatpush.msra.mxu0 0.0
    %926 = vmatpush.msra.mxu0 0.0
    %927 = vmatpush.msra.mxu0 0.0
    %928 = vmatpush.msra.mxu0 0.0
    %929 = vmatpush.msra.mxu0 %v895
    %930 = vmatpush.msra.mxu0 %v894
    %931 = vmatpush.msra.mxu0 %v893
    %932 = vmatpush.msra.mxu0 %v892
    %933 = vmatpush.msra.mxu0 %v891
    %934 = vmatpush.msra.mxu0 %v890
    %935 = vmatpush.msra.mxu0 %v889
    %936 = vmatpush.msra.mxu0 %v888
    %937 = vmatpush.msra.mxu0 %v887
    %938 = vmatpush.msra.mxu0 %v886
    %939 = vmatpush.msra.mxu0 %v885
    %940 = vmatpush.msra.mxu0 %v884
    %941 = vmatmul.f32.gmra.mxu0 %v902
    %v942 = vpop.f32.mrf.mxu0
    %v943 = vadd.f32 %v898, %v942
    %944 = vmatmul.f32.gmra.mxu0 %v905
    %v945 = vpop.f32.mrf.mxu0
    %v946 = vadd.f32 %v898, %v945
    %947 = vmatmul.f32.gmra.mxu0 %v908
    %v948 = vpop.f32.mrf.mxu0
    %v949 = vadd.f32 %v898, %v948
    %950 = vmatmul.f32.gmra.mxu0 %v911
    %v951 = vpop.f32.mrf.mxu0
    %v952 = vadd.f32 %v898, %v951
    %953 = vmatmul.f32.gmra.mxu0 %v914
    %v954 = vpop.f32.mrf.mxu0
    %v955 = vadd.f32 %v898, %v954
    %956 = vmatmul.f32.gmra.mxu0 %v917
    %v957 = vpop.f32.mrf.mxu0
    %v958 = vadd.f32 %v898, %v957
    %959 = vmatmul.f32.gmra.mxu0 %v920
    %v960 = vpop.f32.mrf.mxu0
    %v961 = vadd.f32 %v898, %v960
    %962 = vmatmul.f32.gmra.mxu0 %v923
    %v963 = vpop.f32.mrf.mxu0
    %v964 = vadd.f32 %v898, %v963
    %965 = vdwg.mxu0
    %966 = vst [vmem:[%s7] sm:$0xff] %v943
    %967 = vst [vmem:[%s7 + $0x8] sm:$0xff] %v946
    %968 = vst [vmem:[%s7 + $0x10] sm:$0xff] %v949
    %969 = vst [vmem:[%s7 + $0x18] sm:$0xff] %v952
    %970 = vst [vmem:[%s7 + $0x20] sm:$0xff] %v955
    %971 = vst [vmem:[%s7 + $0x28] sm:$0xff] %v958
    %972 = vst [vmem:[%s7 + $0x30] sm:$0xff] %v961
    %973 = vst [vmem:[%s7 + $0x38] sm:$0xff] %v964
    // Predicated region
    $region50: #{upsample_cnn_forward.1} parent=1 // pred_check
      _
    $region51: #{upsample_cnn_forward.1} parent=1 // pred_check_branch
      %975 = sbr.rel (0) target = $region53
    $region52: #{upsample_cnn_forward.1} parent=1 // pred_region
      _
    $region53: #{upsample_cnn_forward.1} parent=1 // pred_fallthru
      _
    // Predicated region
    $region54: #{upsample_cnn_forward.1} parent=1 // pred_check
      _
    $region55: #{upsample_cnn_forward.1} parent=1 // pred_check_branch
      %977 = sbr.rel (0) target = $region57
    $region56: #{upsample_cnn_forward.1} parent=1 // pred_region
      _
    $region57: #{upsample_cnn_forward.1} parent=1 // pred_fallthru
      _
    %978 = vsyncpa [#allocation5], 1
    %979 = vsyncpa [#allocation7], 1
    %980 = vsyncpa [#allocation10], 1

</llo_original>
